<compile_context>
chip_gen: v6e
topology: v6e:2x2x1
jax: 0.10.0
libtpu: 0.0.40
codegen_flags: <defaults>
</compile_context>

<pallas_src>
import jax
import jax.numpy as jnp
from jax import lax
from jax.experimental import pallas as pl
from jax.experimental.pallas import tpu as pltpu


def hangman_lstm_kernel(ids_ref, emb_ref, wih_ref, whh_ref, b_ref, wfc_ref, bfc_ref, out_ref):
    TB = ids_ref.shape[0]            # T * B (time-major)
    B = out_ref.shape[0]
    T = TB // B
    V, E = emb_ref.shape
    H = whh_ref.shape[0]

    # ---- Hoisted input path (runs once, off the serial recurrence) -------------------
    # table_proj[v] = emb[v] @ Wih^T   -> (V, 4H)
    table_proj = jnp.dot(emb_ref[...], wih_ref[...], preferred_element_type=jnp.float32)
    # One-hot gather of the projected table: x_proj[t*B+b] = table_proj[ids[t,b]] + bias.
    ids = ids_ref[...]                                                        # (TB, 1) int32
    onehot = (ids == lax.broadcasted_iota(jnp.int32, (TB, V), 1)).astype(jnp.float32)
    x_proj = (jnp.dot(onehot, table_proj, preferred_element_type=jnp.float32)
              + b_ref[...])                                                   # (TB, 4H)

    whh = whh_ref[...]               # loop-invariant recurrent weights (stay resident)

    h = jnp.zeros((B, H), jnp.float32)
    c = jnp.zeros((B, H), jnp.float32)

    # ---- Fully-unrolled LSTM recurrence (PyTorch gate order: i, f, g, o) --------------
    # Per step: one small MXU call + full-vreg sigmoid/tanh + VPU cell update.
    for t in range(T):
        gates = (x_proj[t * B:(t + 1) * B, :]
                 + jnp.dot(h, whh, preferred_element_type=jnp.float32))       # (B, 4H)
        sig = jax.nn.sigmoid(gates)   # one EUP pass over the full 4H lanes
        tng = jnp.tanh(gates)         # one EUP pass (only the g block is consumed)
        i = sig[:, 0 * H:1 * H]
        f = sig[:, 1 * H:2 * H]
        g = tng[:, 2 * H:3 * H]
        o = sig[:, 3 * H:4 * H]
        c = f * c + i * g
        h = o * jnp.tanh(c)

    # ---- Final FC on the last hidden state; lane-dense (padded) output store ----------
    out_ref[...] = (jnp.dot(h, wfc_ref[...], preferred_element_type=jnp.float32)
                    + bfc_ref[...])


def hangman_forward(x_ids, params):
    """x_ids: (B, T) int token indices -> logits (B, V) float32."""
    emb = params["embedding"].astype(jnp.float32)                  # (V, E)
    B, T = x_ids.shape
    V, E = emb.shape
    H = params["weight_hh"].shape[1]
    Vp = ((V + 127) // 128) * 128                                  # lane-dense logits width

    # Time-major flat ids so row t*B + b of x_proj is timestep t, batch b.
    ids_tm = jnp.transpose(x_ids.astype(jnp.int32)).reshape(T * B, 1)

    wih_t = params["weight_ih"].T.astype(jnp.float32)              # (E, 4H)
    whh_t = params["weight_hh"].T.astype(jnp.float32)              # (H, 4H)
    bias = (params["bias_ih"] + params["bias_hh"]).reshape(1, 4 * H).astype(jnp.float32)
    wfc_t = params["fc_weight"].T.astype(jnp.float32)              # (H, V)
    bfc = params["fc_bias"].reshape(1, V).astype(jnp.float32)

    # Zero-pad classifier to a multiple of 128 lanes (unmasked dense output store).
    wfc_p = jnp.pad(wfc_t, ((0, 0), (0, Vp - V)))
    bfc_p = jnp.pad(bfc, ((0, 0), (0, Vp - V)))

    vmem = pl.BlockSpec(memory_space=pltpu.MemorySpace.VMEM)
    logits_p = pl.pallas_call(
        hangman_lstm_kernel,
        out_shape=jax.ShapeDtypeStruct((B, Vp), jnp.float32),
        in_specs=[vmem] * 7,
        out_specs=vmem,
    )(ids_tm, emb, wih_t, whh_t, bias, wfc_p, bfc_p)
    return logits_p[:, :V]


def init_params(key, vocab_size, embedding_dim, hidden_dim):
    ks = jax.random.split(key, 7)
    s = 0.1
    return {
        "embedding": s * jax.random.normal(ks[0], (vocab_size, embedding_dim), jnp.float32),
        "weight_ih": s * jax.random.normal(ks[1], (4 * hidden_dim, embedding_dim), jnp.float32),
        "weight_hh": s * jax.random.normal(ks[2], (4 * hidden_dim, hidden_dim), jnp.float32),
        "bias_ih":   s * jax.random.normal(ks[3], (4 * hidden_dim,), jnp.float32),
        "bias_hh":   s * jax.random.normal(ks[4], (4 * hidden_dim,), jnp.float32),
        "fc_weight": s * jax.random.normal(ks[5], (vocab_size, hidden_dim), jnp.float32),
        "fc_bias":   s * jax.random.normal(ks[6], (vocab_size,), jnp.float32),
    }


def reference_forward(x_ids, params):
    """Pure-JAX reference of the PyTorch forward (for sanity check)."""
    emb = params["embedding"]
    H = params["weight_hh"].shape[1]
    x = jnp.take(emb, x_ids, axis=0)             # (B, T, E)
    B, T, E = x.shape

    wih, whh = params["weight_ih"], params["weight_hh"]
    b = params["bias_ih"] + params["bias_hh"]

    def step(carry, x_t):
        h, c = carry
        gates = x_t @ wih.T + h @ whh.T + b
        i = jax.nn.sigmoid(gates[:, 0 * H:1 * H])
        f = jax.nn.sigmoid(gates[:, 1 * H:2 * H])
        g = jnp.tanh(gates[:, 2 * H:3 * H])
        o = jax.nn.sigmoid(gates[:, 3 * H:4 * H])
        c_new = f * c + i * g
        h_new = o * jnp.tanh(c_new)
        return (h_new, c_new), None

    h0 = jnp.zeros((B, H), jnp.float32)
    (h_last, _), _ = lax.scan(step, (h0, h0), jnp.transpose(x, (1, 0, 2)))
    return h_last @ params["fc_weight"].T + params["fc_bias"]


if __name__ == "__main__":
    # Small shapes: vocab=32 (26 letters + specials), embedding=32, hidden=32,
    # batch=2, seq=8.
    VOCAB, EMB, HID = 32, 32, 32
    B, T = 2, 8

    key = jax.random.PRNGKey(0)
    kp, kx = jax.random.split(key)
    params = init_params(kp, VOCAB, EMB, HID)
    x_ids = jax.random.randint(kx, (B, T), 0, VOCAB, dtype=jnp.int32)

    out = jax.jit(hangman_forward)(x_ids, params)
    out = jax.block_until_ready(out)

    ref = reference_forward(x_ids, params)
    assert out.shape == (B, VOCAB)
    assert jnp.allclose(out, ref, atol=1e-4, rtol=1e-4), "mismatch vs reference"

    print("KERNEL_OK")
</pallas_src>

<mosaic_0001>
module attributes {stable_mosaic.version = 11 : i64} {
  func.func @hangman_lstm_kernel(%arg0: memref<16x1xi32, #tpu.memory_space<vmem>>, %arg1: memref<32x32xf32, #tpu.memory_space<vmem>>, %arg2: memref<32x128xf32, #tpu.memory_space<vmem>>, %arg3: memref<32x128xf32, #tpu.memory_space<vmem>>, %arg4: memref<1x128xf32, #tpu.memory_space<vmem>>, %arg5: memref<32x128xf32, #tpu.memory_space<vmem>>, %arg6: memref<1x128xf32, #tpu.memory_space<vmem>>, %arg7: memref<2x128xf32, #tpu.memory_space<vmem>>) attributes {dimension_semantics = [], scalar_prefetch = 0 : i64, scratch_operands = 0 : i64, tpu.core_type = #tpu.core_type<tc>} {
    %c0 = arith.constant 0 : index
    %c0_0 = arith.constant 0 : index
    %0 = vector.load %arg1[%c0, %c0_0] : memref<32x32xf32, #tpu.memory_space<vmem>>, vector<32x32xf32>
    %c0_1 = arith.constant 0 : index
    %c0_2 = arith.constant 0 : index
    %1 = vector.load %arg2[%c0_1, %c0_2] : memref<32x128xf32, #tpu.memory_space<vmem>>, vector<32x128xf32>
    %cst = arith.constant dense<0.000000e+00> : vector<32x128xf32>
    %2 = tpu.matmul %0, %1, %cst {dimension_numbers = #tpu.dot_dimension_numbers<[1], [0], [0], [1], [0, 0, 1, 1], [], []>} : vector<32x32xf32>, vector<32x128xf32>, vector<32x128xf32> -> vector<32x128xf32>
    %c0_3 = arith.constant 0 : index
    %c0_4 = arith.constant 0 : index
    %3 = vector.load %arg0[%c0_3, %c0_4] : memref<16x1xi32, #tpu.memory_space<vmem>>, vector<16x1xi32>
    %4 = tpu.iota {dimensions = array<i32: 1>} : vector<16x32xi32>
    %5 = vector.broadcast %3 : vector<16x1xi32> to vector<16x32xi32>
    %6 = arith.cmpi eq, %5, %4 : vector<16x32xi32>
    %7 = arith.extui %6 : vector<16x32xi1> to vector<16x32xi32>
    %8 = arith.sitofp %7 : vector<16x32xi32> to vector<16x32xf32>
    %cst_5 = arith.constant dense<0.000000e+00> : vector<16x128xf32>
    %9 = tpu.matmul %8, %2, %cst_5 {dimension_numbers = #tpu.dot_dimension_numbers<[1], [0], [0], [1], [0, 0, 1, 1], [], []>} : vector<16x32xf32>, vector<32x128xf32>, vector<16x128xf32> -> vector<16x128xf32>
    %c0_6 = arith.constant 0 : index
    %c0_7 = arith.constant 0 : index
    %10 = vector.load %arg4[%c0_6, %c0_7] : memref<1x128xf32, #tpu.memory_space<vmem>>, vector<1x128xf32>
    %11 = vector.broadcast %10 : vector<1x128xf32> to vector<16x128xf32>
    %12 = arith.addf %9, %11 : vector<16x128xf32>
    %c0_8 = arith.constant 0 : index
    %c0_9 = arith.constant 0 : index
    %13 = vector.load %arg3[%c0_8, %c0_9] : memref<32x128xf32, #tpu.memory_space<vmem>>, vector<32x128xf32>
    %cst_10 = arith.constant 0.000000e+00 : f32
    %14 = vector.broadcast %cst_10 : f32 to vector<2x32xf32>
    %cst_11 = arith.constant 0.000000e+00 : f32
    %15 = vector.broadcast %cst_11 : f32 to vector<2x32xf32>
    %16 = vector.extract_strided_slice %12 {offsets = [0, 0], sizes = [2, 128], strides = [1, 1]} : vector<16x128xf32> to vector<2x128xf32>
    %cst_12 = arith.constant dense<0.000000e+00> : vector<2x128xf32>
    %17 = tpu.matmul %14, %13, %cst_12 {dimension_numbers = #tpu.dot_dimension_numbers<[1], [0], [0], [1], [0, 0, 1, 1], [], []>} : vector<2x32xf32>, vector<32x128xf32>, vector<2x128xf32> -> vector<2x128xf32>
    %18 = arith.addf %16, %17 : vector<2x128xf32>
    %19 = arith.negf %18 : vector<2x128xf32>
    %20 = math.exp %19 : vector<2x128xf32>
    %cst_13 = arith.constant 1.000000e+00 : f32
    %21 = vector.broadcast %cst_13 : f32 to vector<2x128xf32>
    %22 = arith.addf %21, %20 : vector<2x128xf32>
    %23 = arith.divf %21, %22 : vector<2x128xf32>
    %24 = math.tanh %18 : vector<2x128xf32>
    %25 = vector.extract_strided_slice %23 {offsets = [0, 0], sizes = [2, 32], strides = [1, 1]} : vector<2x128xf32> to vector<2x32xf32>
    %26 = vector.extract_strided_slice %23 {offsets = [0, 32], sizes = [2, 32], strides = [1, 1]} : vector<2x128xf32> to vector<2x32xf32>
    %27 = vector.extract_strided_slice %24 {offsets = [0, 64], sizes = [2, 32], strides = [1, 1]} : vector<2x128xf32> to vector<2x32xf32>
    %28 = vector.extract_strided_slice %23 {offsets = [0, 96], sizes = [2, 32], strides = [1, 1]} : vector<2x128xf32> to vector<2x32xf32>
    %29 = arith.mulf %26, %15 : vector<2x32xf32>
    %30 = arith.mulf %25, %27 : vector<2x32xf32>
    %31 = arith.addf %29, %30 : vector<2x32xf32>
    %32 = math.tanh %31 : vector<2x32xf32>
    %33 = arith.mulf %28, %32 : vector<2x32xf32>
    %34 = vector.extract_strided_slice %12 {offsets = [2, 0], sizes = [2, 128], strides = [1, 1]} : vector<16x128xf32> to vector<2x128xf32>
    %cst_14 = arith.constant dense<0.000000e+00> : vector<2x128xf32>
    %35 = tpu.matmul %33, %13, %cst_14 {dimension_numbers = #tpu.dot_dimension_numbers<[1], [0], [0], [1], [0, 0, 1, 1], [], []>} : vector<2x32xf32>, vector<32x128xf32>, vector<2x128xf32> -> vector<2x128xf32>
    %36 = arith.addf %34, %35 : vector<2x128xf32>
    %37 = arith.negf %36 : vector<2x128xf32>
    %38 = math.exp %37 : vector<2x128xf32>
    %cst_15 = arith.constant 1.000000e+00 : f32
    %39 = vector.broadcast %cst_15 : f32 to vector<2x128xf32>
    %40 = arith.addf %39, %38 : vector<2x128xf32>
    %41 = arith.divf %39, %40 : vector<2x128xf32>
    %42 = math.tanh %36 : vector<2x128xf32>
    %43 = vector.extract_strided_slice %41 {offsets = [0, 0], sizes = [2, 32], strides = [1, 1]} : vector<2x128xf32> to vector<2x32xf32>
    %44 = vector.extract_strided_slice %41 {offsets = [0, 32], sizes = [2, 32], strides = [1, 1]} : vector<2x128xf32> to vector<2x32xf32>
    %45 = vector.extract_strided_slice %42 {offsets = [0, 64], sizes = [2, 32], strides = [1, 1]} : vector<2x128xf32> to vector<2x32xf32>
    %46 = vector.extract_strided_slice %41 {offsets = [0, 96], sizes = [2, 32], strides = [1, 1]} : vector<2x128xf32> to vector<2x32xf32>
    %47 = arith.mulf %44, %31 : vector<2x32xf32>
    %48 = arith.mulf %43, %45 : vector<2x32xf32>
    %49 = arith.addf %47, %48 : vector<2x32xf32>
    %50 = math.tanh %49 : vector<2x32xf32>
    %51 = arith.mulf %46, %50 : vector<2x32xf32>
    %52 = vector.extract_strided_slice %12 {offsets = [4, 0], sizes = [2, 128], strides = [1, 1]} : vector<16x128xf32> to vector<2x128xf32>
    %cst_16 = arith.constant dense<0.000000e+00> : vector<2x128xf32>
    %53 = tpu.matmul %51, %13, %cst_16 {dimension_numbers = #tpu.dot_dimension_numbers<[1], [0], [0], [1], [0, 0, 1, 1], [], []>} : vector<2x32xf32>, vector<32x128xf32>, vector<2x128xf32> -> vector<2x128xf32>
    %54 = arith.addf %52, %53 : vector<2x128xf32>
    %55 = arith.negf %54 : vector<2x128xf32>
    %56 = math.exp %55 : vector<2x128xf32>
    %cst_17 = arith.constant 1.000000e+00 : f32
    %57 = vector.broadcast %cst_17 : f32 to vector<2x128xf32>
    %58 = arith.addf %57, %56 : vector<2x128xf32>
    %59 = arith.divf %57, %58 : vector<2x128xf32>
    %60 = math.tanh %54 : vector<2x128xf32>
    %61 = vector.extract_strided_slice %59 {offsets = [0, 0], sizes = [2, 32], strides = [1, 1]} : vector<2x128xf32> to vector<2x32xf32>
    %62 = vector.extract_strided_slice %59 {offsets = [0, 32], sizes = [2, 32], strides = [1, 1]} : vector<2x128xf32> to vector<2x32xf32>
    %63 = vector.extract_strided_slice %60 {offsets = [0, 64], sizes = [2, 32], strides = [1, 1]} : vector<2x128xf32> to vector<2x32xf32>
    %64 = vector.extract_strided_slice %59 {offsets = [0, 96], sizes = [2, 32], strides = [1, 1]} : vector<2x128xf32> to vector<2x32xf32>
    %65 = arith.mulf %62, %49 : vector<2x32xf32>
    %66 = arith.mulf %61, %63 : vector<2x32xf32>
    %67 = arith.addf %65, %66 : vector<2x32xf32>
    %68 = math.tanh %67 : vector<2x32xf32>
    %69 = arith.mulf %64, %68 : vector<2x32xf32>
    %70 = vector.extract_strided_slice %12 {offsets = [6, 0], sizes = [2, 128], strides = [1, 1]} : vector<16x128xf32> to vector<2x128xf32>
    %cst_18 = arith.constant dense<0.000000e+00> : vector<2x128xf32>
    %71 = tpu.matmul %69, %13, %cst_18 {dimension_numbers = #tpu.dot_dimension_numbers<[1], [0], [0], [1], [0, 0, 1, 1], [], []>} : vector<2x32xf32>, vector<32x128xf32>, vector<2x128xf32> -> vector<2x128xf32>
    %72 = arith.addf %70, %71 : vector<2x128xf32>
    %73 = arith.negf %72 : vector<2x128xf32>
    %74 = math.exp %73 : vector<2x128xf32>
    %cst_19 = arith.constant 1.000000e+00 : f32
    %75 = vector.broadcast %cst_19 : f32 to vector<2x128xf32>
    %76 = arith.addf %75, %74 : vector<2x128xf32>
    %77 = arith.divf %75, %76 : vector<2x128xf32>
    %78 = math.tanh %72 : vector<2x128xf32>
    %79 = vector.extract_strided_slice %77 {offsets = [0, 0], sizes = [2, 32], strides = [1, 1]} : vector<2x128xf32> to vector<2x32xf32>
    %80 = vector.extract_strided_slice %77 {offsets = [0, 32], sizes = [2, 32], strides = [1, 1]} : vector<2x128xf32> to vector<2x32xf32>
    %81 = vector.extract_strided_slice %78 {offsets = [0, 64], sizes = [2, 32], strides = [1, 1]} : vector<2x128xf32> to vector<2x32xf32>
    %82 = vector.extract_strided_slice %77 {offsets = [0, 96], sizes = [2, 32], strides = [1, 1]} : vector<2x128xf32> to vector<2x32xf32>
    %83 = arith.mulf %80, %67 : vector<2x32xf32>
    %84 = arith.mulf %79, %81 : vector<2x32xf32>
    %85 = arith.addf %83, %84 : vector<2x32xf32>
    %86 = math.tanh %85 : vector<2x32xf32>
    %87 = arith.mulf %82, %86 : vector<2x32xf32>
    %88 = vector.extract_strided_slice %12 {offsets = [8, 0], sizes = [2, 128], strides = [1, 1]} : vector<16x128xf32> to vector<2x128xf32>
    %cst_20 = arith.constant dense<0.000000e+00> : vector<2x128xf32>
    %89 = tpu.matmul %87, %13, %cst_20 {dimension_numbers = #tpu.dot_dimension_numbers<[1], [0], [0], [1], [0, 0, 1, 1], [], []>} : vector<2x32xf32>, vector<32x128xf32>, vector<2x128xf32> -> vector<2x128xf32>
    %90 = arith.addf %88, %89 : vector<2x128xf32>
    %91 = arith.negf %90 : vector<2x128xf32>
    %92 = math.exp %91 : vector<2x128xf32>
    %cst_21 = arith.constant 1.000000e+00 : f32
    %93 = vector.broadcast %cst_21 : f32 to vector<2x128xf32>
    %94 = arith.addf %93, %92 : vector<2x128xf32>
    %95 = arith.divf %93, %94 : vector<2x128xf32>
    %96 = math.tanh %90 : vector<2x128xf32>
    %97 = vector.extract_strided_slice %95 {offsets = [0, 0], sizes = [2, 32], strides = [1, 1]} : vector<2x128xf32> to vector<2x32xf32>
    %98 = vector.extract_strided_slice %95 {offsets = [0, 32], sizes = [2, 32], strides = [1, 1]} : vector<2x128xf32> to vector<2x32xf32>
    %99 = vector.extract_strided_slice %96 {offsets = [0, 64], sizes = [2, 32], strides = [1, 1]} : vector<2x128xf32> to vector<2x32xf32>
    %100 = vector.extract_strided_slice %95 {offsets = [0, 96], sizes = [2, 32], strides = [1, 1]} : vector<2x128xf32> to vector<2x32xf32>
    %101 = arith.mulf %98, %85 : vector<2x32xf32>
    %102 = arith.mulf %97, %99 : vector<2x32xf32>
    %103 = arith.addf %101, %102 : vector<2x32xf32>
    %104 = math.tanh %103 : vector<2x32xf32>
    %105 = arith.mulf %100, %104 : vector<2x32xf32>
    %106 = vector.extract_strided_slice %12 {offsets = [10, 0], sizes = [2, 128], strides = [1, 1]} : vector<16x128xf32> to vector<2x128xf32>
    %cst_22 = arith.constant dense<0.000000e+00> : vector<2x128xf32>
    %107 = tpu.matmul %105, %13, %cst_22 {dimension_numbers = #tpu.dot_dimension_numbers<[1], [0], [0], [1], [0, 0, 1, 1], [], []>} : vector<2x32xf32>, vector<32x128xf32>, vector<2x128xf32> -> vector<2x128xf32>
    %108 = arith.addf %106, %107 : vector<2x128xf32>
    %109 = arith.negf %108 : vector<2x128xf32>
    %110 = math.exp %109 : vector<2x128xf32>
    %cst_23 = arith.constant 1.000000e+00 : f32
    %111 = vector.broadcast %cst_23 : f32 to vector<2x128xf32>
    %112 = arith.addf %111, %110 : vector<2x128xf32>
    %113 = arith.divf %111, %112 : vector<2x128xf32>
    %114 = math.tanh %108 : vector<2x128xf32>
    %115 = vector.extract_strided_slice %113 {offsets = [0, 0], sizes = [2, 32], strides = [1, 1]} : vector<2x128xf32> to vector<2x32xf32>
    %116 = vector.extract_strided_slice %113 {offsets = [0, 32], sizes = [2, 32], strides = [1, 1]} : vector<2x128xf32> to vector<2x32xf32>
    %117 = vector.extract_strided_slice %114 {offsets = [0, 64], sizes = [2, 32], strides = [1, 1]} : vector<2x128xf32> to vector<2x32xf32>
    %118 = vector.extract_strided_slice %113 {offsets = [0, 96], sizes = [2, 32], strides = [1, 1]} : vector<2x128xf32> to vector<2x32xf32>
    %119 = arith.mulf %116, %103 : vector<2x32xf32>
    %120 = arith.mulf %115, %117 : vector<2x32xf32>
    %121 = arith.addf %119, %120 : vector<2x32xf32>
    %122 = math.tanh %121 : vector<2x32xf32>
    %123 = arith.mulf %118, %122 : vector<2x32xf32>
    %124 = vector.extract_strided_slice %12 {offsets = [12, 0], sizes = [2, 128], strides = [1, 1]} : vector<16x128xf32> to vector<2x128xf32>
    %cst_24 = arith.constant dense<0.000000e+00> : vector<2x128xf32>
    %125 = tpu.matmul %123, %13, %cst_24 {dimension_numbers = #tpu.dot_dimension_numbers<[1], [0], [0], [1], [0, 0, 1, 1], [], []>} : vector<2x32xf32>, vector<32x128xf32>, vector<2x128xf32> -> vector<2x128xf32>
    %126 = arith.addf %124, %125 : vector<2x128xf32>
    %127 = arith.negf %126 : vector<2x128xf32>
    %128 = math.exp %127 : vector<2x128xf32>
    %cst_25 = arith.constant 1.000000e+00 : f32
    %129 = vector.broadcast %cst_25 : f32 to vector<2x128xf32>
    %130 = arith.addf %129, %128 : vector<2x128xf32>
    %131 = arith.divf %129, %130 : vector<2x128xf32>
    %132 = math.tanh %126 : vector<2x128xf32>
    %133 = vector.extract_strided_slice %131 {offsets = [0, 0], sizes = [2, 32], strides = [1, 1]} : vector<2x128xf32> to vector<2x32xf32>
    %134 = vector.extract_strided_slice %131 {offsets = [0, 32], sizes = [2, 32], strides = [1, 1]} : vector<2x128xf32> to vector<2x32xf32>
    %135 = vector.extract_strided_slice %132 {offsets = [0, 64], sizes = [2, 32], strides = [1, 1]} : vector<2x128xf32> to vector<2x32xf32>
    %136 = vector.extract_strided_slice %131 {offsets = [0, 96], sizes = [2, 32], strides = [1, 1]} : vector<2x128xf32> to vector<2x32xf32>
    %137 = arith.mulf %134, %121 : vector<2x32xf32>
    %138 = arith.mulf %133, %135 : vector<2x32xf32>
    %139 = arith.addf %137, %138 : vector<2x32xf32>
    %140 = math.tanh %139 : vector<2x32xf32>
    %141 = arith.mulf %136, %140 : vector<2x32xf32>
    %142 = vector.extract_strided_slice %12 {offsets = [14, 0], sizes = [2, 128], strides = [1, 1]} : vector<16x128xf32> to vector<2x128xf32>
    %cst_26 = arith.constant dense<0.000000e+00> : vector<2x128xf32>
    %143 = tpu.matmul %141, %13, %cst_26 {dimension_numbers = #tpu.dot_dimension_numbers<[1], [0], [0], [1], [0, 0, 1, 1], [], []>} : vector<2x32xf32>, vector<32x128xf32>, vector<2x128xf32> -> vector<2x128xf32>
    %144 = arith.addf %142, %143 : vector<2x128xf32>
    %145 = arith.negf %144 : vector<2x128xf32>
    %146 = math.exp %145 : vector<2x128xf32>
    %cst_27 = arith.constant 1.000000e+00 : f32
    %147 = vector.broadcast %cst_27 : f32 to vector<2x128xf32>
    %148 = arith.addf %147, %146 : vector<2x128xf32>
    %149 = arith.divf %147, %148 : vector<2x128xf32>
    %150 = math.tanh %144 : vector<2x128xf32>
    %151 = vector.extract_strided_slice %149 {offsets = [0, 0], sizes = [2, 32], strides = [1, 1]} : vector<2x128xf32> to vector<2x32xf32>
    %152 = vector.extract_strided_slice %149 {offsets = [0, 32], sizes = [2, 32], strides = [1, 1]} : vector<2x128xf32> to vector<2x32xf32>
    %153 = vector.extract_strided_slice %150 {offsets = [0, 64], sizes = [2, 32], strides = [1, 1]} : vector<2x128xf32> to vector<2x32xf32>
    %154 = vector.extract_strided_slice %149 {offsets = [0, 96], sizes = [2, 32], strides = [1, 1]} : vector<2x128xf32> to vector<2x32xf32>
    %155 = arith.mulf %152, %139 : vector<2x32xf32>
    %156 = arith.mulf %151, %153 : vector<2x32xf32>
    %157 = arith.addf %155, %156 : vector<2x32xf32>
    %158 = math.tanh %157 : vector<2x32xf32>
    %159 = arith.mulf %154, %158 : vector<2x32xf32>
    %c0_28 = arith.constant 0 : index
    %c0_29 = arith.constant 0 : index
    %160 = vector.load %arg5[%c0_28, %c0_29] : memref<32x128xf32, #tpu.memory_space<vmem>>, vector<32x128xf32>
    %cst_30 = arith.constant dense<0.000000e+00> : vector<2x128xf32>
    %161 = tpu.matmul %159, %160, %cst_30 {dimension_numbers = #tpu.dot_dimension_numbers<[1], [0], [0], [1], [0, 0, 1, 1], [], []>} : vector<2x32xf32>, vector<32x128xf32>, vector<2x128xf32> -> vector<2x128xf32>
    %c0_31 = arith.constant 0 : index
    %c0_32 = arith.constant 0 : index
    %162 = vector.load %arg6[%c0_31, %c0_32] : memref<1x128xf32, #tpu.memory_space<vmem>>, vector<1x128xf32>
    %163 = vector.broadcast %162 : vector<1x128xf32> to vector<2x128xf32>
    %164 = arith.addf %161, %163 : vector<2x128xf32>
    %c0_33 = arith.constant 0 : index
    %c0_34 = arith.constant 0 : index
    %165 = vector.load %arg7[%c0_33, %c0_34] : memref<2x128xf32, #tpu.memory_space<vmem>>, vector<2x128xf32>
    tpu.vector_store %arg7[%c0_33, %c0_34], %164 {strides = array<i32>} : memref<2x128xf32, #tpu.memory_space<vmem>>, vector<2x128xf32>,
    return
  }
}

</mosaic_0001>

<llo_original>
// kernel: hangman_forward.1
$region0: #{hangman_forward.1}
  #allocation0 [shape = 'u32[]', space=smem, size = 0x4, offset = 0x4, fixed_abs, tag = 'smem constant byte address 0x4 - core index']
  #allocation1 [shape = 'u32[144,128]{1,0:T(1,128)}', space=vmem, size = 0x12000, scoped, tag = 'internal scratch']
  %s0 = inlined_call_operand.vmem [shape: s32[16,1], index: 0, kind: input, shape index: {}]
  %s1 = inlined_call_operand.vmem [shape: f32[32,32], index: 1, kind: input, shape index: {}]
  %s2 = inlined_call_operand.vmem [shape: f32[32,128], index: 2, kind: input, shape index: {}]
  %s3 = inlined_call_operand.vmem [shape: f32[32,128], index: 3, kind: input, shape index: {}]
  %s4 = inlined_call_operand.vmem [shape: f32[1,128], index: 4, kind: input, shape index: {}]
  %s5 = inlined_call_operand.vmem [shape: f32[32,128], index: 5, kind: input, shape index: {}]
  %s6 = inlined_call_operand.vmem [shape: f32[1,128], index: 6, kind: input, shape index: {}]
  %s7 = inlined_call_operand.hbm [shape: f32[2,128], index: 7, kind: output, shape index: {}]
  %s8 = sld [smem:[#allocation0]]
  $region38: #{hangman_forward.1} parent=0
    _
  %s10 = ssub.s32 1, %s8
  %s11 = scalar_select 0, %s10, %s8
  $region1: #{hangman_forward.1} parent=0
    #allocation2 [shape = 'u8[1024]{0}', space=vmem, size = 0x400, scoped, tag = 'output window, operand 0, single buffered']
    #allocation3 [shape = 's32[1]{0}', space=sflag, size = 0x4, scoped, tag = 'scoped memory for hangman_forward.1']
    %12 = vsyncpa [#allocation3], 0
    // Predicated region
    $region2: #{hangman_forward.1} parent=1 // pred_check
      _
    $region3: #{hangman_forward.1} parent=1 // pred_check_branch
      %14 = sbr.rel (0) target = $region5
    $region4: #{hangman_forward.1} parent=1 // pred_region
      _
    $region5: #{hangman_forward.1} parent=1 // pred_fallthru
      _
    // Predicated region
    $region6: #{hangman_forward.1} parent=1 // pred_check
      _
    $region7: #{hangman_forward.1} parent=1 // pred_check_branch
      %16 = sbr.rel (0) target = $region9
    $region8: #{hangman_forward.1} parent=1 // pred_region
      _
    $region9: #{hangman_forward.1} parent=1 // pred_fallthru
      _
    // Predicated region
    $region10: #{hangman_forward.1} parent=1 // pred_check
      _
    $region11: #{hangman_forward.1} parent=1 // pred_check_branch
      %18 = sbr.rel (0) target = $region13
    $region12: #{hangman_forward.1} parent=1 // pred_region
      _
    $region13: #{hangman_forward.1} parent=1 // pred_fallthru
      _
    // Predicated region
    $region14: #{hangman_forward.1} parent=1 // pred_check
      _
    $region15: #{hangman_forward.1} parent=1 // pred_check_branch
      %20 = sbr.rel (0) target = $region17
    $region16: #{hangman_forward.1} parent=1 // pred_region
      _
    $region17: #{hangman_forward.1} parent=1 // pred_fallthru
      _
    // Predicated region
    $region18: #{hangman_forward.1} parent=1 // pred_check
      _
    $region19: #{hangman_forward.1} parent=1 // pred_check_branch
      %22 = sbr.rel (0) target = $region21
    $region20: #{hangman_forward.1} parent=1 // pred_region
      _
    $region21: #{hangman_forward.1} parent=1 // pred_fallthru
      _
    // Predicated region
    $region22: #{hangman_forward.1} parent=1 // pred_check
      _
    $region23: #{hangman_forward.1} parent=1 // pred_check_branch
      %24 = sbr.rel (0) target = $region25
    $region24: #{hangman_forward.1} parent=1 // pred_region
      _
    $region25: #{hangman_forward.1} parent=1 // pred_fallthru
      _
    // Predicated region
    $region26: #{hangman_forward.1} parent=1 // pred_check
      _
    $region27: #{hangman_forward.1} parent=1 // pred_check_branch
      %26 = sbr.rel (0) target = $region29
    $region28: #{hangman_forward.1} parent=1 // pred_region
      _
    $region29: #{hangman_forward.1} parent=1 // pred_fallthru
      _
    %v27 = vld [vmem:[%s1] sm:$0xff]
    %v28 = vld [vmem:[%s1 + $0x8] sm:$0xff]
    %v29 = vld [vmem:[%s1 + $0x10] sm:$0xff]
    %v30 = vld [vmem:[%s1 + $0x18] sm:$0xff]
    %v31 = vld [vmem:[%s2] sm:$0xff]
    %v32 = vld [vmem:[%s2 + $0x8] sm:$0xff]
    %v33 = vld [vmem:[%s2 + $0x10] sm:$0xff]
    %v34 = vld [vmem:[%s2 + $0x18] sm:$0xff]
    %vm35 = vcmask 261120
    %v37 = vsel %vm35, %v27, 0
    %v40 = vsel %vm35, %v28, 0
    %v43 = vsel %vm35, %v29, 0
    %v46 = vsel %vm35, %v30, 0
    %48 = vmatprep.subr.mxu0 0.0
    %49 = vmatpush1.msra.mxu0 0.0
    %50 = vmatprep.subr.mxu0 0.0
    %51 = vmatpush1.msra.mxu0 0.0
    %52 = vmatprep.subr.mxu0 0.0
    %53 = vmatpush1.msra.mxu0 0.0
    %54 = vmatprep.subr.mxu0 0.0
    %55 = vmatpush1.msra.mxu0 0.0
    %56 = vmatprep.subr.mxu0 0.0
    %57 = vmatpush1.msra.mxu0 0.0
    %58 = vmatprep.subr.mxu0 0.0
    %59 = vmatpush1.msra.mxu0 0.0
    %60 = vmatprep.subr.mxu0 0.0
    %61 = vmatpush1.msra.mxu0 0.0
    %62 = vmatprep.subr.mxu0 0.0
    %63 = vmatpush1.msra.mxu0 0.0
    %64 = vmatprep.subr.mxu0 0.0
    %65 = vmatpush1.msra.mxu0 0.0
    %66 = vmatprep.subr.mxu0 0.0
    %67 = vmatpush1.msra.mxu0 0.0
    %68 = vmatprep.subr.mxu0 0.0
    %69 = vmatpush1.msra.mxu0 0.0
    %70 = vmatprep.subr.mxu0 0.0
    %71 = vmatpush1.msra.mxu0 0.0
    %72 = vmatprep.subr.mxu0 0.0
    %73 = vmatpush1.msra.mxu0 %v34
    %74 = vmatprep.subr.mxu0 0.0
    %75 = vmatpush1.msra.mxu0 %v33
    %76 = vmatprep.subr.mxu0 0.0
    %77 = vmatpush1.msra.mxu0 %v32
    %78 = vmatprep.subr.mxu0 0.0
    %79 = vmatpush1.msra.mxu0 %v31
    %80 = vmatprep.subr.mxu0 0.0
    %81 = vmatpush2.msra.mxu0 0.0
    %82 = vmatprep.subr.mxu0 0.0
    %83 = vmatpush2.msra.mxu0 0.0
    %84 = vmatprep.subr.mxu0 0.0
    %85 = vmatpush2.msra.mxu0 0.0
    %86 = vmatprep.subr.mxu0 0.0
    %87 = vmatpush2.msra.mxu0 0.0
    %88 = vmatprep.subr.mxu0 0.0
    %89 = vmatpush2.msra.mxu0 0.0
    %90 = vmatprep.subr.mxu0 0.0
    %91 = vmatpush2.msra.mxu0 0.0
    %92 = vmatprep.subr.mxu0 0.0
    %93 = vmatpush2.msra.mxu0 0.0
    %94 = vmatprep.subr.mxu0 0.0
    %95 = vmatpush2.msra.mxu0 0.0
    %96 = vmatprep.subr.mxu0 0.0
    %97 = vmatpush2.msra.mxu0 0.0
    %98 = vmatprep.subr.mxu0 0.0
    %99 = vmatpush2.msra.mxu0 0.0
    %100 = vmatprep.subr.mxu0 0.0
    %101 = vmatpush2.msra.mxu0 0.0
    %102 = vmatprep.subr.mxu0 0.0
    %103 = vmatpush2.msra.mxu0 0.0
    %104 = vmatprep.subr.mxu0 0.0
    %105 = vmatpush2.msra.mxu0 0.0
    %106 = vmatprep.subr.mxu0 0.0
    %107 = vmatpush2.msra.mxu0 0.0
    %108 = vmatprep.subr.mxu0 0.0
    %109 = vmatpush2.msra.mxu0 0.0
    %110 = vmatprep.subr.mxu0 0.0
    %111 = vmatpush2.msra.mxu0 0.0
    %112 = vmatprep.mubr.f32.mxu0 0.0
    %113 = vmatmul.mubr.f32.gmra.mxu0 %v37
    %v114 = vpop.f32.mrf.mxu0
    %v115 = vadd.f32 0.0, %v114
    %v116 = vpop.f32.mrf.mxu0
    %117 = vmatprep.mubr.f32.mxu0 0.0
    %118 = vmatmul.mubr.f32.gmra.mxu0 %v40
    %v119 = vpop.f32.mrf.mxu0
    %v120 = vadd.f32 0.0, %v119
    %v121 = vpop.f32.mrf.mxu0
    %122 = vmatprep.mubr.f32.mxu0 0.0
    %123 = vmatmul.mubr.f32.gmra.mxu0 %v43
    %v124 = vpop.f32.mrf.mxu0
    %v125 = vadd.f32 0.0, %v124
    %v126 = vpop.f32.mrf.mxu0
    %127 = vmatprep.mubr.f32.mxu0 0.0
    %128 = vmatmul.mubr.f32.gmra.mxu0 %v46
    %v129 = vpop.f32.mrf.mxu0
    %v130 = vadd.f32 0.0, %v129
    %v131 = vpop.f32.mrf.mxu0
    %132 = vdwg.mxu0
    %v133 = vld [vmem:[%s0] sm:$0xff]
    %v134 = vld [vmem:[%s0 + $0x8] sm:$0xff]
    %v135 = vlaneseq
    %v136 = vand.u32 %v135, 127
    %137 = vset.pattern.permute.xlu0 0
    %138 = vperm.xlu0 %137, %v133
    %v139 = vpop.permute.xlu0 %138
    %140 = vset.pattern.permute.xlu0 0
    %141 = vperm.xlu0 %140, %v134
    %v142 = vpop.permute.xlu0 %141
    %vm143 = vcmp.eq.s32.totalorder %v139, %v136
    %vm144 = vcmp.eq.s32.totalorder %v142, %v136
    %v145 = vsel %vm143, 1, 0
    %v146 = vsel %vm144, 1, 0
    %v147 = vcvt.s32.f32 %v145
    %v148 = vcvt.s32.f32 %v146
    %v149 = vld [vmem:[%s4] sm:$0x1]
    %v151 = vlaneseq
    %v152 = vshrl.u32 %v151, 7
    %v153 = vsub.s32 0, %v152
    %v154 = vrot.slane %v149, %v153
    %v157 = vsel %vm35, %v147, 0
    %v160 = vsel %vm35, %v148, 0
    %162 = vmatprep.subr.mxu0 0.0
    %163 = vmatpush1.msra.mxu0 0.0
    %164 = vmatprep.subr.mxu0 0.0
    %165 = vmatpush1.msra.mxu0 0.0
    %166 = vmatprep.subr.mxu0 0.0
    %167 = vmatpush1.msra.mxu0 0.0
    %168 = vmatprep.subr.mxu0 0.0
    %169 = vmatpush1.msra.mxu0 0.0
    %170 = vmatprep.subr.mxu0 0.0
    %171 = vmatpush1.msra.mxu0 0.0
    %172 = vmatprep.subr.mxu0 0.0
    %173 = vmatpush1.msra.mxu0 0.0
    %174 = vmatprep.subr.mxu0 0.0
    %175 = vmatpush1.msra.mxu0 0.0
    %176 = vmatprep.subr.mxu0 0.0
    %177 = vmatpush1.msra.mxu0 0.0
    %178 = vmatprep.subr.mxu0 0.0
    %179 = vmatpush1.msra.mxu0 0.0
    %180 = vmatprep.subr.mxu0 0.0
    %181 = vmatpush1.msra.mxu0 0.0
    %182 = vmatprep.subr.mxu0 0.0
    %183 = vmatpush1.msra.mxu0 0.0
    %184 = vmatprep.subr.mxu0 0.0
    %185 = vmatpush1.msra.mxu0 0.0
    %186 = vmatprep.subr.mxu0 0.0
    %187 = vmatpush1.msra.mxu0 %v130
    %188 = vmatprep.subr.mxu0 0.0
    %189 = vmatpush1.msra.mxu0 %v125
    %190 = vmatprep.subr.mxu0 0.0
    %191 = vmatpush1.msra.mxu0 %v120
    %192 = vmatprep.subr.mxu0 0.0
    %193 = vmatpush1.msra.mxu0 %v115
    %194 = vmatprep.subr.mxu0 0.0
    %195 = vmatpush2.msra.mxu0 0.0
    %196 = vmatprep.subr.mxu0 0.0
    %197 = vmatpush2.msra.mxu0 0.0
    %198 = vmatprep.subr.mxu0 0.0
    %199 = vmatpush2.msra.mxu0 0.0
    %200 = vmatprep.subr.mxu0 0.0
    %201 = vmatpush2.msra.mxu0 0.0
    %202 = vmatprep.subr.mxu0 0.0
    %203 = vmatpush2.msra.mxu0 0.0
    %204 = vmatprep.subr.mxu0 0.0
    %205 = vmatpush2.msra.mxu0 0.0
    %206 = vmatprep.subr.mxu0 0.0
    %207 = vmatpush2.msra.mxu0 0.0
    %208 = vmatprep.subr.mxu0 0.0
    %209 = vmatpush2.msra.mxu0 0.0
    %210 = vmatprep.subr.mxu0 0.0
    %211 = vmatpush2.msra.mxu0 0.0
    %212 = vmatprep.subr.mxu0 0.0
    %213 = vmatpush2.msra.mxu0 0.0
    %214 = vmatprep.subr.mxu0 0.0
    %215 = vmatpush2.msra.mxu0 0.0
    %216 = vmatprep.subr.mxu0 0.0
    %217 = vmatpush2.msra.mxu0 0.0
    %218 = vmatprep.subr.mxu0 0.0
    %219 = vmatpush2.msra.mxu0 0.0
    %220 = vmatprep.subr.mxu0 0.0
    %221 = vmatpush2.msra.mxu0 0.0
    %222 = vmatprep.subr.mxu0 0.0
    %223 = vmatpush2.msra.mxu0 0.0
    %224 = vmatprep.subr.mxu0 0.0
    %225 = vmatpush2.msra.mxu0 0.0
    %226 = vmatprep.mubr.f32.mxu0 0.0
    %227 = vmatmul.mubr.f32.gmra.mxu0 %v157
    %v228 = vpop.f32.mrf.mxu0
    %v229 = vadd.f32 %v154, %v228
    %v230 = vpop.f32.mrf.mxu0
    %231 = vmatprep.mubr.f32.mxu0 0.0
    %232 = vmatmul.mubr.f32.gmra.mxu0 %v160
    %v233 = vpop.f32.mrf.mxu0
    %v234 = vadd.f32 %v154, %v233
    %v235 = vpop.f32.mrf.mxu0
    %236 = vdwg.mxu0
    %v237 = vld [vmem:[%s3] sm:$0xff]
    %v238 = vld [vmem:[%s3 + $0x8] sm:$0xff]
    %v239 = vld [vmem:[%s3 + $0x10] sm:$0xff]
    %v240 = vld [vmem:[%s3 + $0x18] sm:$0xff]
    %v242 = vsel %vm35, 0.0, 0
    %244 = vmatprep.subr.mxu0 0.0
    %245 = vmatpush1.msra.mxu0 0.0
    %246 = vmatprep.subr.mxu0 0.0
    %247 = vmatpush1.msra.mxu0 0.0
    %248 = vmatprep.subr.mxu0 0.0
    %249 = vmatpush1.msra.mxu0 0.0
    %250 = vmatprep.subr.mxu0 0.0
    %251 = vmatpush1.msra.mxu0 0.0
    %252 = vmatprep.subr.mxu0 0.0
    %253 = vmatpush1.msra.mxu0 0.0
    %254 = vmatprep.subr.mxu0 0.0
    %255 = vmatpush1.msra.mxu0 0.0
    %256 = vmatprep.subr.mxu0 0.0
    %257 = vmatpush1.msra.mxu0 0.0
    %258 = vmatprep.subr.mxu0 0.0
    %259 = vmatpush1.msra.mxu0 0.0
    %260 = vmatprep.subr.mxu0 0.0
    %261 = vmatpush1.msra.mxu0 0.0
    %262 = vmatprep.subr.mxu0 0.0
    %263 = vmatpush1.msra.mxu0 0.0
    %264 = vmatprep.subr.mxu0 0.0
    %265 = vmatpush1.msra.mxu0 0.0
    %266 = vmatprep.subr.mxu0 0.0
    %267 = vmatpush1.msra.mxu0 0.0
    %268 = vmatprep.subr.mxu0 0.0
    %269 = vmatpush1.msra.mxu0 %v240
    %270 = vmatprep.subr.mxu0 0.0
    %271 = vmatpush1.msra.mxu0 %v239
    %272 = vmatprep.subr.mxu0 0.0
    %273 = vmatpush1.msra.mxu0 %v238
    %274 = vmatprep.subr.mxu0 0.0
    %275 = vmatpush1.msra.mxu0 %v237
    %276 = vmatprep.subr.mxu0 0.0
    %277 = vmatpush2.msra.mxu0 0.0
    %278 = vmatprep.subr.mxu0 0.0
    %279 = vmatpush2.msra.mxu0 0.0
    %280 = vmatprep.subr.mxu0 0.0
    %281 = vmatpush2.msra.mxu0 0.0
    %282 = vmatprep.subr.mxu0 0.0
    %283 = vmatpush2.msra.mxu0 0.0
    %284 = vmatprep.subr.mxu0 0.0
    %285 = vmatpush2.msra.mxu0 0.0
    %286 = vmatprep.subr.mxu0 0.0
    %287 = vmatpush2.msra.mxu0 0.0
    %288 = vmatprep.subr.mxu0 0.0
    %289 = vmatpush2.msra.mxu0 0.0
    %290 = vmatprep.subr.mxu0 0.0
    %291 = vmatpush2.msra.mxu0 0.0
    %292 = vmatprep.subr.mxu0 0.0
    %293 = vmatpush2.msra.mxu0 0.0
    %294 = vmatprep.subr.mxu0 0.0
    %295 = vmatpush2.msra.mxu0 0.0
    %296 = vmatprep.subr.mxu0 0.0
    %297 = vmatpush2.msra.mxu0 0.0
    %298 = vmatprep.subr.mxu0 0.0
    %299 = vmatpush2.msra.mxu0 0.0
    %300 = vmatprep.subr.mxu0 0.0
    %301 = vmatpush2.msra.mxu0 0.0
    %302 = vmatprep.subr.mxu0 0.0
    %303 = vmatpush2.msra.mxu0 0.0
    %304 = vmatprep.subr.mxu0 0.0
    %305 = vmatpush2.msra.mxu0 0.0
    %306 = vmatprep.subr.mxu0 0.0
    %307 = vmatpush2.msra.mxu0 0.0
    %308 = vmatprep.mubr.f32.mxu0 0.0
    %309 = vmatmul.mubr.f32.gmra.mxu0 %v242
    %v310 = vpop.f32.mrf.mxu0
    %v311 = vadd.f32 0.0, %v310
    %v312 = vpop.f32.mrf.mxu0
    %313 = vdwg.mxu0
    %v314 = vadd.f32 %v229, %v311
    %v315 = vxor.u32 %v314, 2147483648
    %v316 = vmul.f32 %v315, 1.442695
    %v317 = vpow.pop %v316
    %v318 = vadd.f32 %v317, 1.0
    %v319 = vrcp.pop %v318
    %v320 = vmul.f32 1.0, %v319
    %v321 = vtanh.pop %v314
    %v322 = vmul.f32 %v320, 0.0
    %324 = vrot.lane.b32.xlu0 %v321, 64
    %v325 = vpop.permute.xlu0 %324
    %v327 = vmul.f32 %v320, %v325
    %329 = vrot.lane.b32.xlu0 %v327, 32
    %v330 = vpop.permute.xlu0 %329
    %v332 = vadd.f32 %v322, %v330
    %v333 = vtanh.pop %v332
    %335 = vrot.lane.b32.xlu0 %v333, 64
    %v336 = vpop.permute.xlu0 %335
    %v338 = vmul.f32 %v320, %v336
    %340 = vrot.lane.b32.xlu0 %v338, 32
    %v341 = vpop.permute.xlu0 %340
    %v342 = vsel %vm35, %v341, 0
    %344 = vmatprep.subr.mxu0 0.0
    %345 = vmatpush1.msra.mxu0 0.0
    %346 = vmatprep.subr.mxu0 0.0
    %347 = vmatpush1.msra.mxu0 0.0
    %348 = vmatprep.subr.mxu0 0.0
    %349 = vmatpush1.msra.mxu0 0.0
    %350 = vmatprep.subr.mxu0 0.0
    %351 = vmatpush1.msra.mxu0 0.0
    %352 = vmatprep.subr.mxu0 0.0
    %353 = vmatpush1.msra.mxu0 0.0
    %354 = vmatprep.subr.mxu0 0.0
    %355 = vmatpush1.msra.mxu0 0.0
    %356 = vmatprep.subr.mxu0 0.0
    %357 = vmatpush1.msra.mxu0 0.0
    %358 = vmatprep.subr.mxu0 0.0
    %359 = vmatpush1.msra.mxu0 0.0
    %360 = vmatprep.subr.mxu0 0.0
    %361 = vmatpush1.msra.mxu0 0.0
    %362 = vmatprep.subr.mxu0 0.0
    %363 = vmatpush1.msra.mxu0 0.0
    %364 = vmatprep.subr.mxu0 0.0
    %365 = vmatpush1.msra.mxu0 0.0
    %366 = vmatprep.subr.mxu0 0.0
    %367 = vmatpush1.msra.mxu0 0.0
    %368 = vmatprep.subr.mxu0 0.0
    %369 = vmatpush1.msra.mxu0 %v240
    %370 = vmatprep.subr.mxu0 0.0
    %371 = vmatpush1.msra.mxu0 %v239
    %372 = vmatprep.subr.mxu0 0.0
    %373 = vmatpush1.msra.mxu0 %v238
    %374 = vmatprep.subr.mxu0 0.0
    %375 = vmatpush1.msra.mxu0 %v237
    %376 = vmatprep.subr.mxu0 0.0
    %377 = vmatpush2.msra.mxu0 0.0
    %378 = vmatprep.subr.mxu0 0.0
    %379 = vmatpush2.msra.mxu0 0.0
    %380 = vmatprep.subr.mxu0 0.0
    %381 = vmatpush2.msra.mxu0 0.0
    %382 = vmatprep.subr.mxu0 0.0
    %383 = vmatpush2.msra.mxu0 0.0
    %384 = vmatprep.subr.mxu0 0.0
    %385 = vmatpush2.msra.mxu0 0.0
    %386 = vmatprep.subr.mxu0 0.0
    %387 = vmatpush2.msra.mxu0 0.0
    %388 = vmatprep.subr.mxu0 0.0
    %389 = vmatpush2.msra.mxu0 0.0
    %390 = vmatprep.subr.mxu0 0.0
    %391 = vmatpush2.msra.mxu0 0.0
    %392 = vmatprep.subr.mxu0 0.0
    %393 = vmatpush2.msra.mxu0 0.0
    %394 = vmatprep.subr.mxu0 0.0
    %395 = vmatpush2.msra.mxu0 0.0
    %396 = vmatprep.subr.mxu0 0.0
    %397 = vmatpush2.msra.mxu0 0.0
    %398 = vmatprep.subr.mxu0 0.0
    %399 = vmatpush2.msra.mxu0 0.0
    %400 = vmatprep.subr.mxu0 0.0
    %401 = vmatpush2.msra.mxu0 0.0
    %402 = vmatprep.subr.mxu0 0.0
    %403 = vmatpush2.msra.mxu0 0.0
    %404 = vmatprep.subr.mxu0 0.0
    %405 = vmatpush2.msra.mxu0 0.0
    %406 = vmatprep.subr.mxu0 0.0
    %407 = vmatpush2.msra.mxu0 0.0
    %408 = vmatprep.mubr.f32.mxu0 0.0
    %409 = vmatmul.mubr.f32.gmra.mxu0 %v342
    %v410 = vpop.f32.mrf.mxu0
    %v411 = vadd.f32 0.0, %v410
    %v412 = vpop.f32.mrf.mxu0
    %413 = vdwg.mxu0
    %v415 = vrot.slane %v411, 6
    %v417 = vadd.f32 %v229, %v415
    %v418 = vxor.u32 %v417, 2147483648
    %v419 = vmul.f32 %v418, 1.442695
    %v420 = vpow.pop %v419
    %v421 = vadd.f32 %v420, 1.0
    %v422 = vrcp.pop %v421
    %v423 = vmul.f32 1.0, %v422
    %v424 = vtanh.pop %v417
    %v426 = vrot.slane %v332, 6
    %v428 = vmul.f32 %v423, %v426
    %430 = vrot.lane.b32.xlu0 %v424, 64
    %v431 = vpop.permute.xlu0 %430
    %v433 = vmul.f32 %v423, %v431
    %435 = vrot.lane.b32.xlu0 %v433, 32
    %v436 = vpop.permute.xlu0 %435
    %v438 = vadd.f32 %v428, %v436
    %v439 = vtanh.pop %v438
    %441 = vrot.lane.b32.xlu0 %v439, 64
    %v442 = vpop.permute.xlu0 %441
    %v444 = vmul.f32 %v423, %v442
    %v446 = vrot.slane %v444, 2
    %447 = vrot.lane.b32.xlu0 %v446, 32
    %v448 = vpop.permute.xlu0 %447
    %v449 = vsel %vm35, %v448, 0
    %451 = vmatprep.subr.mxu0 0.0
    %452 = vmatpush1.msra.mxu0 0.0
    %453 = vmatprep.subr.mxu0 0.0
    %454 = vmatpush1.msra.mxu0 0.0
    %455 = vmatprep.subr.mxu0 0.0
    %456 = vmatpush1.msra.mxu0 0.0
    %457 = vmatprep.subr.mxu0 0.0
    %458 = vmatpush1.msra.mxu0 0.0
    %459 = vmatprep.subr.mxu0 0.0
    %460 = vmatpush1.msra.mxu0 0.0
    %461 = vmatprep.subr.mxu0 0.0
    %462 = vmatpush1.msra.mxu0 0.0
    %463 = vmatprep.subr.mxu0 0.0
    %464 = vmatpush1.msra.mxu0 0.0
    %465 = vmatprep.subr.mxu0 0.0
    %466 = vmatpush1.msra.mxu0 0.0
    %467 = vmatprep.subr.mxu0 0.0
    %468 = vmatpush1.msra.mxu0 0.0
    %469 = vmatprep.subr.mxu0 0.0
    %470 = vmatpush1.msra.mxu0 0.0
    %471 = vmatprep.subr.mxu0 0.0
    %472 = vmatpush1.msra.mxu0 0.0
    %473 = vmatprep.subr.mxu0 0.0
    %474 = vmatpush1.msra.mxu0 0.0
    %475 = vmatprep.subr.mxu0 0.0
    %476 = vmatpush1.msra.mxu0 %v240
    %477 = vmatprep.subr.mxu0 0.0
    %478 = vmatpush1.msra.mxu0 %v239
    %479 = vmatprep.subr.mxu0 0.0
    %480 = vmatpush1.msra.mxu0 %v238
    %481 = vmatprep.subr.mxu0 0.0
    %482 = vmatpush1.msra.mxu0 %v237
    %483 = vmatprep.subr.mxu0 0.0
    %484 = vmatpush2.msra.mxu0 0.0
    %485 = vmatprep.subr.mxu0 0.0
    %486 = vmatpush2.msra.mxu0 0.0
    %487 = vmatprep.subr.mxu0 0.0
    %488 = vmatpush2.msra.mxu0 0.0
    %489 = vmatprep.subr.mxu0 0.0
    %490 = vmatpush2.msra.mxu0 0.0
    %491 = vmatprep.subr.mxu0 0.0
    %492 = vmatpush2.msra.mxu0 0.0
    %493 = vmatprep.subr.mxu0 0.0
    %494 = vmatpush2.msra.mxu0 0.0
    %495 = vmatprep.subr.mxu0 0.0
    %496 = vmatpush2.msra.mxu0 0.0
    %497 = vmatprep.subr.mxu0 0.0
    %498 = vmatpush2.msra.mxu0 0.0
    %499 = vmatprep.subr.mxu0 0.0
    %500 = vmatpush2.msra.mxu0 0.0
    %501 = vmatprep.subr.mxu0 0.0
    %502 = vmatpush2.msra.mxu0 0.0
    %503 = vmatprep.subr.mxu0 0.0
    %504 = vmatpush2.msra.mxu0 0.0
    %505 = vmatprep.subr.mxu0 0.0
    %506 = vmatpush2.msra.mxu0 0.0
    %507 = vmatprep.subr.mxu0 0.0
    %508 = vmatpush2.msra.mxu0 0.0
    %509 = vmatprep.subr.mxu0 0.0
    %510 = vmatpush2.msra.mxu0 0.0
    %511 = vmatprep.subr.mxu0 0.0
    %512 = vmatpush2.msra.mxu0 0.0
    %513 = vmatprep.subr.mxu0 0.0
    %514 = vmatpush2.msra.mxu0 0.0
    %515 = vmatprep.mubr.f32.mxu0 0.0
    %516 = vmatmul.mubr.f32.gmra.mxu0 %v449
    %v517 = vpop.f32.mrf.mxu0
    %v518 = vadd.f32 0.0, %v517
    %v519 = vpop.f32.mrf.mxu0
    %520 = vdwg.mxu0
    %v522 = vrot.slane %v518, 4
    %v524 = vadd.f32 %v229, %v522
    %v525 = vxor.u32 %v524, 2147483648
    %v526 = vmul.f32 %v525, 1.442695
    %v527 = vpow.pop %v526
    %v528 = vadd.f32 %v527, 1.0
    %v529 = vrcp.pop %v528
    %v530 = vmul.f32 1.0, %v529
    %v531 = vtanh.pop %v524
    %v533 = vrot.slane %v438, 6
    %v535 = vmul.f32 %v530, %v533
    %537 = vrot.lane.b32.xlu0 %v531, 64
    %v538 = vpop.permute.xlu0 %537
    %v540 = vmul.f32 %v530, %v538
    %542 = vrot.lane.b32.xlu0 %v540, 32
    %v543 = vpop.permute.xlu0 %542
    %v545 = vadd.f32 %v535, %v543
    %v546 = vtanh.pop %v545
    %548 = vrot.lane.b32.xlu0 %v546, 64
    %v549 = vpop.permute.xlu0 %548
    %v551 = vmul.f32 %v530, %v549
    %v553 = vrot.slane %v551, 4
    %554 = vrot.lane.b32.xlu0 %v553, 32
    %v555 = vpop.permute.xlu0 %554
    %v556 = vsel %vm35, %v555, 0
    %558 = vmatprep.subr.mxu0 0.0
    %559 = vmatpush1.msra.mxu0 0.0
    %560 = vmatprep.subr.mxu0 0.0
    %561 = vmatpush1.msra.mxu0 0.0
    %562 = vmatprep.subr.mxu0 0.0
    %563 = vmatpush1.msra.mxu0 0.0
    %564 = vmatprep.subr.mxu0 0.0
    %565 = vmatpush1.msra.mxu0 0.0
    %566 = vmatprep.subr.mxu0 0.0
    %567 = vmatpush1.msra.mxu0 0.0
    %568 = vmatprep.subr.mxu0 0.0
    %569 = vmatpush1.msra.mxu0 0.0
    %570 = vmatprep.subr.mxu0 0.0
    %571 = vmatpush1.msra.mxu0 0.0
    %572 = vmatprep.subr.mxu0 0.0
    %573 = vmatpush1.msra.mxu0 0.0
    %574 = vmatprep.subr.mxu0 0.0
    %575 = vmatpush1.msra.mxu0 0.0
    %576 = vmatprep.subr.mxu0 0.0
    %577 = vmatpush1.msra.mxu0 0.0
    %578 = vmatprep.subr.mxu0 0.0
    %579 = vmatpush1.msra.mxu0 0.0
    %580 = vmatprep.subr.mxu0 0.0
    %581 = vmatpush1.msra.mxu0 0.0
    %582 = vmatprep.subr.mxu0 0.0
    %583 = vmatpush1.msra.mxu0 %v240
    %584 = vmatprep.subr.mxu0 0.0
    %585 = vmatpush1.msra.mxu0 %v239
    %586 = vmatprep.subr.mxu0 0.0
    %587 = vmatpush1.msra.mxu0 %v238
    %588 = vmatprep.subr.mxu0 0.0
    %589 = vmatpush1.msra.mxu0 %v237
    %590 = vmatprep.subr.mxu0 0.0
    %591 = vmatpush2.msra.mxu0 0.0
    %592 = vmatprep.subr.mxu0 0.0
    %593 = vmatpush2.msra.mxu0 0.0
    %594 = vmatprep.subr.mxu0 0.0
    %595 = vmatpush2.msra.mxu0 0.0
    %596 = vmatprep.subr.mxu0 0.0
    %597 = vmatpush2.msra.mxu0 0.0
    %598 = vmatprep.subr.mxu0 0.0
    %599 = vmatpush2.msra.mxu0 0.0
    %600 = vmatprep.subr.mxu0 0.0
    %601 = vmatpush2.msra.mxu0 0.0
    %602 = vmatprep.subr.mxu0 0.0
    %603 = vmatpush2.msra.mxu0 0.0
    %604 = vmatprep.subr.mxu0 0.0
    %605 = vmatpush2.msra.mxu0 0.0
    %606 = vmatprep.subr.mxu0 0.0
    %607 = vmatpush2.msra.mxu0 0.0
    %608 = vmatprep.subr.mxu0 0.0
    %609 = vmatpush2.msra.mxu0 0.0
    %610 = vmatprep.subr.mxu0 0.0
    %611 = vmatpush2.msra.mxu0 0.0
    %612 = vmatprep.subr.mxu0 0.0
    %613 = vmatpush2.msra.mxu0 0.0
    %614 = vmatprep.subr.mxu0 0.0
    %615 = vmatpush2.msra.mxu0 0.0
    %616 = vmatprep.subr.mxu0 0.0
    %617 = vmatpush2.msra.mxu0 0.0
    %618 = vmatprep.subr.mxu0 0.0
    %619 = vmatpush2.msra.mxu0 0.0
    %620 = vmatprep.subr.mxu0 0.0
    %621 = vmatpush2.msra.mxu0 0.0
    %622 = vmatprep.mubr.f32.mxu0 0.0
    %623 = vmatmul.mubr.f32.gmra.mxu0 %v556
    %v624 = vpop.f32.mrf.mxu0
    %v625 = vadd.f32 0.0, %v624
    %v626 = vpop.f32.mrf.mxu0
    %627 = vdwg.mxu0
    %v629 = vrot.slane %v625, 2
    %v631 = vadd.f32 %v229, %v629
    %v632 = vxor.u32 %v631, 2147483648
    %v633 = vmul.f32 %v632, 1.442695
    %v634 = vpow.pop %v633
    %v635 = vadd.f32 %v634, 1.0
    %v636 = vrcp.pop %v635
    %v637 = vmul.f32 1.0, %v636
    %v638 = vtanh.pop %v631
    %v640 = vrot.slane %v545, 6
    %v642 = vmul.f32 %v637, %v640
    %644 = vrot.lane.b32.xlu0 %v638, 64
    %v645 = vpop.permute.xlu0 %644
    %v647 = vmul.f32 %v637, %v645
    %649 = vrot.lane.b32.xlu0 %v647, 32
    %v650 = vpop.permute.xlu0 %649
    %v652 = vadd.f32 %v642, %v650
    %v653 = vtanh.pop %v652
    %655 = vrot.lane.b32.xlu0 %v653, 64
    %v656 = vpop.permute.xlu0 %655
    %v658 = vmul.f32 %v637, %v656
    %v660 = vrot.slane %v658, 6
    %661 = vrot.lane.b32.xlu0 %v660, 32
    %v662 = vpop.permute.xlu0 %661
    %v663 = vsel %vm35, %v662, 0
    %665 = vmatprep.subr.mxu0 0.0
    %666 = vmatpush1.msra.mxu0 0.0
    %667 = vmatprep.subr.mxu0 0.0
    %668 = vmatpush1.msra.mxu0 0.0
    %669 = vmatprep.subr.mxu0 0.0
    %670 = vmatpush1.msra.mxu0 0.0
    %671 = vmatprep.subr.mxu0 0.0
    %672 = vmatpush1.msra.mxu0 0.0
    %673 = vmatprep.subr.mxu0 0.0
    %674 = vmatpush1.msra.mxu0 0.0
    %675 = vmatprep.subr.mxu0 0.0
    %676 = vmatpush1.msra.mxu0 0.0
    %677 = vmatprep.subr.mxu0 0.0
    %678 = vmatpush1.msra.mxu0 0.0
    %679 = vmatprep.subr.mxu0 0.0
    %680 = vmatpush1.msra.mxu0 0.0
    %681 = vmatprep.subr.mxu0 0.0
    %682 = vmatpush1.msra.mxu0 0.0
    %683 = vmatprep.subr.mxu0 0.0
    %684 = vmatpush1.msra.mxu0 0.0
    %685 = vmatprep.subr.mxu0 0.0
    %686 = vmatpush1.msra.mxu0 0.0
    %687 = vmatprep.subr.mxu0 0.0
    %688 = vmatpush1.msra.mxu0 0.0
    %689 = vmatprep.subr.mxu0 0.0
    %690 = vmatpush1.msra.mxu0 %v240
    %691 = vmatprep.subr.mxu0 0.0
    %692 = vmatpush1.msra.mxu0 %v239
    %693 = vmatprep.subr.mxu0 0.0
    %694 = vmatpush1.msra.mxu0 %v238
    %695 = vmatprep.subr.mxu0 0.0
    %696 = vmatpush1.msra.mxu0 %v237
    %697 = vmatprep.subr.mxu0 0.0
    %698 = vmatpush2.msra.mxu0 0.0
    %699 = vmatprep.subr.mxu0 0.0
    %700 = vmatpush2.msra.mxu0 0.0
    %701 = vmatprep.subr.mxu0 0.0
    %702 = vmatpush2.msra.mxu0 0.0
    %703 = vmatprep.subr.mxu0 0.0
    %704 = vmatpush2.msra.mxu0 0.0
    %705 = vmatprep.subr.mxu0 0.0
    %706 = vmatpush2.msra.mxu0 0.0
    %707 = vmatprep.subr.mxu0 0.0
    %708 = vmatpush2.msra.mxu0 0.0
    %709 = vmatprep.subr.mxu0 0.0
    %710 = vmatpush2.msra.mxu0 0.0
    %711 = vmatprep.subr.mxu0 0.0
    %712 = vmatpush2.msra.mxu0 0.0
    %713 = vmatprep.subr.mxu0 0.0
    %714 = vmatpush2.msra.mxu0 0.0
    %715 = vmatprep.subr.mxu0 0.0
    %716 = vmatpush2.msra.mxu0 0.0
    %717 = vmatprep.subr.mxu0 0.0
    %718 = vmatpush2.msra.mxu0 0.0
    %719 = vmatprep.subr.mxu0 0.0
    %720 = vmatpush2.msra.mxu0 0.0
    %721 = vmatprep.subr.mxu0 0.0
    %722 = vmatpush2.msra.mxu0 0.0
    %723 = vmatprep.subr.mxu0 0.0
    %724 = vmatpush2.msra.mxu0 0.0
    %725 = vmatprep.subr.mxu0 0.0
    %726 = vmatpush2.msra.mxu0 0.0
    %727 = vmatprep.subr.mxu0 0.0
    %728 = vmatpush2.msra.mxu0 0.0
    %729 = vmatprep.mubr.f32.mxu0 0.0
    %730 = vmatmul.mubr.f32.gmra.mxu0 %v663
    %v731 = vpop.f32.mrf.mxu0
    %v732 = vadd.f32 0.0, %v731
    %v733 = vpop.f32.mrf.mxu0
    %734 = vdwg.mxu0
    %v735 = vadd.f32 %v234, %v732
    %v736 = vxor.u32 %v735, 2147483648
    %v737 = vmul.f32 %v736, 1.442695
    %v738 = vpow.pop %v737
    %v739 = vadd.f32 %v738, 1.0
    %v740 = vrcp.pop %v739
    %v741 = vmul.f32 1.0, %v740
    %v742 = vtanh.pop %v735
    %v744 = vrot.slane %v652, 6
    %v746 = vmul.f32 %v741, %v744
    %748 = vrot.lane.b32.xlu0 %v742, 64
    %v749 = vpop.permute.xlu0 %748
    %v751 = vmul.f32 %v741, %v749
    %753 = vrot.lane.b32.xlu0 %v751, 32
    %v754 = vpop.permute.xlu0 %753
    %v756 = vadd.f32 %v746, %v754
    %v757 = vtanh.pop %v756
    %759 = vrot.lane.b32.xlu0 %v757, 64
    %v760 = vpop.permute.xlu0 %759
    %v762 = vmul.f32 %v741, %v760
    %764 = vrot.lane.b32.xlu0 %v762, 32
    %v765 = vpop.permute.xlu0 %764
    %v766 = vsel %vm35, %v765, 0
    %768 = vmatprep.subr.mxu0 0.0
    %769 = vmatpush1.msra.mxu0 0.0
    %770 = vmatprep.subr.mxu0 0.0
    %771 = vmatpush1.msra.mxu0 0.0
    %772 = vmatprep.subr.mxu0 0.0
    %773 = vmatpush1.msra.mxu0 0.0
    %774 = vmatprep.subr.mxu0 0.0
    %775 = vmatpush1.msra.mxu0 0.0
    %776 = vmatprep.subr.mxu0 0.0
    %777 = vmatpush1.msra.mxu0 0.0
    %778 = vmatprep.subr.mxu0 0.0
    %779 = vmatpush1.msra.mxu0 0.0
    %780 = vmatprep.subr.mxu0 0.0
    %781 = vmatpush1.msra.mxu0 0.0
    %782 = vmatprep.subr.mxu0 0.0
    %783 = vmatpush1.msra.mxu0 0.0
    %784 = vmatprep.subr.mxu0 0.0
    %785 = vmatpush1.msra.mxu0 0.0
    %786 = vmatprep.subr.mxu0 0.0
    %787 = vmatpush1.msra.mxu0 0.0
    %788 = vmatprep.subr.mxu0 0.0
    %789 = vmatpush1.msra.mxu0 0.0
    %790 = vmatprep.subr.mxu0 0.0
    %791 = vmatpush1.msra.mxu0 0.0
    %792 = vmatprep.subr.mxu0 0.0
    %793 = vmatpush1.msra.mxu0 %v240
    %794 = vmatprep.subr.mxu0 0.0
    %795 = vmatpush1.msra.mxu0 %v239
    %796 = vmatprep.subr.mxu0 0.0
    %797 = vmatpush1.msra.mxu0 %v238
    %798 = vmatprep.subr.mxu0 0.0
    %799 = vmatpush1.msra.mxu0 %v237
    %800 = vmatprep.subr.mxu0 0.0
    %801 = vmatpush2.msra.mxu0 0.0
    %802 = vmatprep.subr.mxu0 0.0
    %803 = vmatpush2.msra.mxu0 0.0
    %804 = vmatprep.subr.mxu0 0.0
    %805 = vmatpush2.msra.mxu0 0.0
    %806 = vmatprep.subr.mxu0 0.0
    %807 = vmatpush2.msra.mxu0 0.0
    %808 = vmatprep.subr.mxu0 0.0
    %809 = vmatpush2.msra.mxu0 0.0
    %810 = vmatprep.subr.mxu0 0.0
    %811 = vmatpush2.msra.mxu0 0.0
    %812 = vmatprep.subr.mxu0 0.0
    %813 = vmatpush2.msra.mxu0 0.0
    %814 = vmatprep.subr.mxu0 0.0
    %815 = vmatpush2.msra.mxu0 0.0
    %816 = vmatprep.subr.mxu0 0.0
    %817 = vmatpush2.msra.mxu0 0.0
    %818 = vmatprep.subr.mxu0 0.0
    %819 = vmatpush2.msra.mxu0 0.0
    %820 = vmatprep.subr.mxu0 0.0
    %821 = vmatpush2.msra.mxu0 0.0
    %822 = vmatprep.subr.mxu0 0.0
    %823 = vmatpush2.msra.mxu0 0.0
    %824 = vmatprep.subr.mxu0 0.0
    %825 = vmatpush2.msra.mxu0 0.0
    %826 = vmatprep.subr.mxu0 0.0
    %827 = vmatpush2.msra.mxu0 0.0
    %828 = vmatprep.subr.mxu0 0.0
    %829 = vmatpush2.msra.mxu0 0.0
    %830 = vmatprep.subr.mxu0 0.0
    %831 = vmatpush2.msra.mxu0 0.0
    %832 = vmatprep.mubr.f32.mxu0 0.0
    %833 = vmatmul.mubr.f32.gmra.mxu0 %v766
    %v834 = vpop.f32.mrf.mxu0
    %v835 = vadd.f32 0.0, %v834
    %v836 = vpop.f32.mrf.mxu0
    %837 = vdwg.mxu0
    %v839 = vrot.slane %v835, 6
    %v841 = vadd.f32 %v234, %v839
    %v842 = vxor.u32 %v841, 2147483648
    %v843 = vmul.f32 %v842, 1.442695
    %v844 = vpow.pop %v843
    %v845 = vadd.f32 %v844, 1.0
    %v846 = vrcp.pop %v845
    %v847 = vmul.f32 1.0, %v846
    %v848 = vtanh.pop %v841
    %v850 = vrot.slane %v756, 6
    %v852 = vmul.f32 %v847, %v850
    %854 = vrot.lane.b32.xlu0 %v848, 64
    %v855 = vpop.permute.xlu0 %854
    %v857 = vmul.f32 %v847, %v855
    %859 = vrot.lane.b32.xlu0 %v857, 32
    %v860 = vpop.permute.xlu0 %859
    %v862 = vadd.f32 %v852, %v860
    %v863 = vtanh.pop %v862
    %865 = vrot.lane.b32.xlu0 %v863, 64
    %v866 = vpop.permute.xlu0 %865
    %v868 = vmul.f32 %v847, %v866
    %v870 = vrot.slane %v868, 2
    %871 = vrot.lane.b32.xlu0 %v870, 32
    %v872 = vpop.permute.xlu0 %871
    %v873 = vsel %vm35, %v872, 0
    %875 = vmatprep.subr.mxu0 0.0
    %876 = vmatpush1.msra.mxu0 0.0
    %877 = vmatprep.subr.mxu0 0.0
    %878 = vmatpush1.msra.mxu0 0.0
    %879 = vmatprep.subr.mxu0 0.0
    %880 = vmatpush1.msra.mxu0 0.0
    %881 = vmatprep.subr.mxu0 0.0
    %882 = vmatpush1.msra.mxu0 0.0
    %883 = vmatprep.subr.mxu0 0.0
    %884 = vmatpush1.msra.mxu0 0.0
    %885 = vmatprep.subr.mxu0 0.0
    %886 = vmatpush1.msra.mxu0 0.0
    %887 = vmatprep.subr.mxu0 0.0
    %888 = vmatpush1.msra.mxu0 0.0
    %889 = vmatprep.subr.mxu0 0.0
    %890 = vmatpush1.msra.mxu0 0.0
    %891 = vmatprep.subr.mxu0 0.0
    %892 = vmatpush1.msra.mxu0 0.0
    %893 = vmatprep.subr.mxu0 0.0
    %894 = vmatpush1.msra.mxu0 0.0
    %895 = vmatprep.subr.mxu0 0.0
    %896 = vmatpush1.msra.mxu0 0.0
    %897 = vmatprep.subr.mxu0 0.0
    %898 = vmatpush1.msra.mxu0 0.0
    %899 = vmatprep.subr.mxu0 0.0
    %900 = vmatpush1.msra.mxu0 %v240
    %901 = vmatprep.subr.mxu0 0.0
    %902 = vmatpush1.msra.mxu0 %v239
    %903 = vmatprep.subr.mxu0 0.0
    %904 = vmatpush1.msra.mxu0 %v238
    %905 = vmatprep.subr.mxu0 0.0
    %906 = vmatpush1.msra.mxu0 %v237
    %907 = vmatprep.subr.mxu0 0.0
    %908 = vmatpush2.msra.mxu0 0.0
    %909 = vmatprep.subr.mxu0 0.0
    %910 = vmatpush2.msra.mxu0 0.0
    %911 = vmatprep.subr.mxu0 0.0
    %912 = vmatpush2.msra.mxu0 0.0
    %913 = vmatprep.subr.mxu0 0.0
    %914 = vmatpush2.msra.mxu0 0.0
    %915 = vmatprep.subr.mxu0 0.0
    %916 = vmatpush2.msra.mxu0 0.0
    %917 = vmatprep.subr.mxu0 0.0
    %918 = vmatpush2.msra.mxu0 0.0
    %919 = vmatprep.subr.mxu0 0.0
    %920 = vmatpush2.msra.mxu0 0.0
    %921 = vmatprep.subr.mxu0 0.0
    %922 = vmatpush2.msra.mxu0 0.0
    %923 = vmatprep.subr.mxu0 0.0
    %924 = vmatpush2.msra.mxu0 0.0
    %925 = vmatprep.subr.mxu0 0.0
    %926 = vmatpush2.msra.mxu0 0.0
    %927 = vmatprep.subr.mxu0 0.0
    %928 = vmatpush2.msra.mxu0 0.0
    %929 = vmatprep.subr.mxu0 0.0
    %930 = vmatpush2.msra.mxu0 0.0
    %931 = vmatprep.subr.mxu0 0.0
    %932 = vmatpush2.msra.mxu0 0.0
    %933 = vmatprep.subr.mxu0 0.0
    %934 = vmatpush2.msra.mxu0 0.0
    %935 = vmatprep.subr.mxu0 0.0
    %936 = vmatpush2.msra.mxu0 0.0
    %937 = vmatprep.subr.mxu0 0.0
    %938 = vmatpush2.msra.mxu0 0.0
    %939 = vmatprep.mubr.f32.mxu0 0.0
    %940 = vmatmul.mubr.f32.gmra.mxu0 %v873
    %v941 = vpop.f32.mrf.mxu0
    %v942 = vadd.f32 0.0, %v941
    %v943 = vpop.f32.mrf.mxu0
    %944 = vdwg.mxu0
    %v946 = vrot.slane %v942, 4
    %v948 = vadd.f32 %v234, %v946
    %v949 = vxor.u32 %v948, 2147483648
    %v950 = vmul.f32 %v949, 1.442695
    %v951 = vpow.pop %v950
    %v952 = vadd.f32 %v951, 1.0
    %v953 = vrcp.pop %v952
    %v954 = vmul.f32 1.0, %v953
    %v955 = vtanh.pop %v948
    %v957 = vrot.slane %v862, 6
    %v959 = vmul.f32 %v954, %v957
    %961 = vrot.lane.b32.xlu0 %v955, 64
    %v962 = vpop.permute.xlu0 %961
    %v964 = vmul.f32 %v954, %v962
    %966 = vrot.lane.b32.xlu0 %v964, 32
    %v967 = vpop.permute.xlu0 %966
    %v969 = vadd.f32 %v959, %v967
    %v970 = vtanh.pop %v969
    %972 = vrot.lane.b32.xlu0 %v970, 64
    %v973 = vpop.permute.xlu0 %972
    %v975 = vmul.f32 %v954, %v973
    %v977 = vrot.slane %v975, 4
    %978 = vrot.lane.b32.xlu0 %v977, 32
    %v979 = vpop.permute.xlu0 %978
    %v980 = vsel %vm35, %v979, 0
    %982 = vmatprep.subr.mxu0 0.0
    %983 = vmatpush1.msra.mxu0 0.0
    %984 = vmatprep.subr.mxu0 0.0
    %985 = vmatpush1.msra.mxu0 0.0
    %986 = vmatprep.subr.mxu0 0.0
    %987 = vmatpush1.msra.mxu0 0.0
    %988 = vmatprep.subr.mxu0 0.0
    %989 = vmatpush1.msra.mxu0 0.0
    %990 = vmatprep.subr.mxu0 0.0
    %991 = vmatpush1.msra.mxu0 0.0
    %992 = vmatprep.subr.mxu0 0.0
    %993 = vmatpush1.msra.mxu0 0.0
    %994 = vmatprep.subr.mxu0 0.0
    %995 = vmatpush1.msra.mxu0 0.0
    %996 = vmatprep.subr.mxu0 0.0
    %997 = vmatpush1.msra.mxu0 0.0
    %998 = vmatprep.subr.mxu0 0.0
    %999 = vmatpush1.msra.mxu0 0.0
    %1000 = vmatprep.subr.mxu0 0.0
    %1001 = vmatpush1.msra.mxu0 0.0
    %1002 = vmatprep.subr.mxu0 0.0
    %1003 = vmatpush1.msra.mxu0 0.0
    %1004 = vmatprep.subr.mxu0 0.0
    %1005 = vmatpush1.msra.mxu0 0.0
    %1006 = vmatprep.subr.mxu0 0.0
    %1007 = vmatpush1.msra.mxu0 %v240
    %1008 = vmatprep.subr.mxu0 0.0
    %1009 = vmatpush1.msra.mxu0 %v239
    %1010 = vmatprep.subr.mxu0 0.0
    %1011 = vmatpush1.msra.mxu0 %v238
    %1012 = vmatprep.subr.mxu0 0.0
    %1013 = vmatpush1.msra.mxu0 %v237
    %1014 = vmatprep.subr.mxu0 0.0
    %1015 = vmatpush2.msra.mxu0 0.0
    %1016 = vmatprep.subr.mxu0 0.0
    %1017 = vmatpush2.msra.mxu0 0.0
    %1018 = vmatprep.subr.mxu0 0.0
    %1019 = vmatpush2.msra.mxu0 0.0
    %1020 = vmatprep.subr.mxu0 0.0
    %1021 = vmatpush2.msra.mxu0 0.0
    %1022 = vmatprep.subr.mxu0 0.0
    %1023 = vmatpush2.msra.mxu0 0.0
    %1024 = vmatprep.subr.mxu0 0.0
    %1025 = vmatpush2.msra.mxu0 0.0
    %1026 = vmatprep.subr.mxu0 0.0
    %1027 = vmatpush2.msra.mxu0 0.0
    %1028 = vmatprep.subr.mxu0 0.0
    %1029 = vmatpush2.msra.mxu0 0.0
    %1030 = vmatprep.subr.mxu0 0.0
    %1031 = vmatpush2.msra.mxu0 0.0
    %1032 = vmatprep.subr.mxu0 0.0
    %1033 = vmatpush2.msra.mxu0 0.0
    %1034 = vmatprep.subr.mxu0 0.0
    %1035 = vmatpush2.msra.mxu0 0.0
    %1036 = vmatprep.subr.mxu0 0.0
    %1037 = vmatpush2.msra.mxu0 0.0
    %1038 = vmatprep.subr.mxu0 0.0
    %1039 = vmatpush2.msra.mxu0 0.0
    %1040 = vmatprep.subr.mxu0 0.0
    %1041 = vmatpush2.msra.mxu0 0.0
    %1042 = vmatprep.subr.mxu0 0.0
    %1043 = vmatpush2.msra.mxu0 0.0
    %1044 = vmatprep.subr.mxu0 0.0
    %1045 = vmatpush2.msra.mxu0 0.0
    %1046 = vmatprep.mubr.f32.mxu0 0.0
    %1047 = vmatmul.mubr.f32.gmra.mxu0 %v980
    %v1048 = vpop.f32.mrf.mxu0
    %v1049 = vadd.f32 0.0, %v1048
    %v1050 = vpop.f32.mrf.mxu0
    %1051 = vdwg.mxu0
    %v1053 = vrot.slane %v1049, 2
    %v1055 = vadd.f32 %v234, %v1053
    %v1056 = vxor.u32 %v1055, 2147483648
    %v1057 = vmul.f32 %v1056, 1.442695
    %v1058 = vpow.pop %v1057
    %v1059 = vadd.f32 %v1058, 1.0
    %v1060 = vrcp.pop %v1059
    %v1061 = vmul.f32 1.0, %v1060
    %v1062 = vtanh.pop %v1055
    %v1064 = vrot.slane %v969, 6
    %v1066 = vmul.f32 %v1061, %v1064
    %1068 = vrot.lane.b32.xlu0 %v1062, 64
    %v1069 = vpop.permute.xlu0 %1068
    %v1071 = vmul.f32 %v1061, %v1069
    %1073 = vrot.lane.b32.xlu0 %v1071, 32
    %v1074 = vpop.permute.xlu0 %1073
    %v1076 = vadd.f32 %v1066, %v1074
    %v1077 = vtanh.pop %v1076
    %1079 = vrot.lane.b32.xlu0 %v1077, 64
    %v1080 = vpop.permute.xlu0 %1079
    %v1082 = vmul.f32 %v1061, %v1080
    %v1083 = vld [vmem:[%s5] sm:$0xff]
    %v1084 = vld [vmem:[%s5 + $0x8] sm:$0xff]
    %v1085 = vld [vmem:[%s5 + $0x10] sm:$0xff]
    %v1086 = vld [vmem:[%s5 + $0x18] sm:$0xff]
    %v1087 = vld [vmem:[%s6] sm:$0x1]
    %v1089 = vlaneseq
    %v1090 = vshrl.u32 %v1089, 7
    %v1091 = vsub.s32 0, %v1090
    %v1092 = vrot.slane %v1087, %v1091
    %v1095 = vrot.slane %v1082, 6
    %1096 = vrot.lane.b32.xlu0 %v1095, 32
    %v1097 = vpop.permute.xlu0 %1096
    %v1098 = vsel %vm35, %v1097, 0
    %1100 = vmatprep.subr.mxu0 0.0
    %1101 = vmatpush1.msra.mxu0 0.0
    %1102 = vmatprep.subr.mxu0 0.0
    %1103 = vmatpush1.msra.mxu0 0.0
    %1104 = vmatprep.subr.mxu0 0.0
    %1105 = vmatpush1.msra.mxu0 0.0
    %1106 = vmatprep.subr.mxu0 0.0
    %1107 = vmatpush1.msra.mxu0 0.0
    %1108 = vmatprep.subr.mxu0 0.0
    %1109 = vmatpush1.msra.mxu0 0.0
    %1110 = vmatprep.subr.mxu0 0.0
    %1111 = vmatpush1.msra.mxu0 0.0
    %1112 = vmatprep.subr.mxu0 0.0
    %1113 = vmatpush1.msra.mxu0 0.0
    %1114 = vmatprep.subr.mxu0 0.0
    %1115 = vmatpush1.msra.mxu0 0.0
    %1116 = vmatprep.subr.mxu0 0.0
    %1117 = vmatpush1.msra.mxu0 0.0
    %1118 = vmatprep.subr.mxu0 0.0
    %1119 = vmatpush1.msra.mxu0 0.0
    %1120 = vmatprep.subr.mxu0 0.0
    %1121 = vmatpush1.msra.mxu0 0.0
    %1122 = vmatprep.subr.mxu0 0.0
    %1123 = vmatpush1.msra.mxu0 0.0
    %1124 = vmatprep.subr.mxu0 0.0
    %1125 = vmatpush1.msra.mxu0 %v1086
    %1126 = vmatprep.subr.mxu0 0.0
    %1127 = vmatpush1.msra.mxu0 %v1085
    %1128 = vmatprep.subr.mxu0 0.0
    %1129 = vmatpush1.msra.mxu0 %v1084
    %1130 = vmatprep.subr.mxu0 0.0
    %1131 = vmatpush1.msra.mxu0 %v1083
    %1132 = vmatprep.subr.mxu0 0.0
    %1133 = vmatpush2.msra.mxu0 0.0
    %1134 = vmatprep.subr.mxu0 0.0
    %1135 = vmatpush2.msra.mxu0 0.0
    %1136 = vmatprep.subr.mxu0 0.0
    %1137 = vmatpush2.msra.mxu0 0.0
    %1138 = vmatprep.subr.mxu0 0.0
    %1139 = vmatpush2.msra.mxu0 0.0
    %1140 = vmatprep.subr.mxu0 0.0
    %1141 = vmatpush2.msra.mxu0 0.0
    %1142 = vmatprep.subr.mxu0 0.0
    %1143 = vmatpush2.msra.mxu0 0.0
    %1144 = vmatprep.subr.mxu0 0.0
    %1145 = vmatpush2.msra.mxu0 0.0
    %1146 = vmatprep.subr.mxu0 0.0
    %1147 = vmatpush2.msra.mxu0 0.0
    %1148 = vmatprep.subr.mxu0 0.0
    %1149 = vmatpush2.msra.mxu0 0.0
    %1150 = vmatprep.subr.mxu0 0.0
    %1151 = vmatpush2.msra.mxu0 0.0
    %1152 = vmatprep.subr.mxu0 0.0
    %1153 = vmatpush2.msra.mxu0 0.0
    %1154 = vmatprep.subr.mxu0 0.0
    %1155 = vmatpush2.msra.mxu0 0.0
    %1156 = vmatprep.subr.mxu0 0.0
    %1157 = vmatpush2.msra.mxu0 0.0
    %1158 = vmatprep.subr.mxu0 0.0
    %1159 = vmatpush2.msra.mxu0 0.0
    %1160 = vmatprep.subr.mxu0 0.0
    %1161 = vmatpush2.msra.mxu0 0.0
    %1162 = vmatprep.subr.mxu0 0.0
    %1163 = vmatpush2.msra.mxu0 0.0
    %1164 = vmatprep.mubr.f32.mxu0 0.0
    %1165 = vmatmul.mubr.f32.gmra.mxu0 %v1098
    %v1166 = vpop.f32.mrf.mxu0
    %v1167 = vadd.f32 %v1092, %v1166
    %v1168 = vpop.f32.mrf.mxu0
    %1169 = vdwg.mxu0
    %1170 = vst [vmem:[#allocation2] sm:$0x3] %v1167
    // Predicated region
    $region30: #{hangman_forward.1} parent=1 // pred_check
      _
    $region31: #{hangman_forward.1} parent=1 // pred_check_branch
      %1172 = sbr.rel (0) target = $region33
    $region32: #{hangman_forward.1} parent=1 // pred_region
      %s1174 = ssub.s32 32, 32
      %1175 = vsyncadd [#allocation3], %s1174
      %s1177 = sshll.u32 [#allocation2], 4
      %s1178 = int_to_ptr.vmem [resolvable:$true] %s1177
      %1180 = dma.vmem_to_hbm [thread:$0]  %s1178, 32, %s7, [#allocation3]
    $region33: #{hangman_forward.1} parent=1 // pred_fallthru
      _
    // Predicated region
    $region34: #{hangman_forward.1} parent=1 // pred_check
      _
    $region35: #{hangman_forward.1} parent=1 // pred_check_branch
      %1182 = sbr.rel (0) target = $region37
    $region36: #{hangman_forward.1} parent=1 // pred_region
      %1183 = dma.done [#allocation3], 32
    $region37: #{hangman_forward.1} parent=1 // pred_fallthru
      _
    %1184 = vsyncpa [#allocation3], 1

</llo_original>
